<compile_context>
chip_gen: v7x
topology: tpu7x:2x2x1
jax: 0.10.0
libtpu: 0.0.40
codegen_flags: <defaults>
</compile_context>

<pallas_src>
import functools
import math

import jax
import jax.numpy as jnp
from jax.experimental import pallas as pl
from jax.experimental.pallas import tpu as pltpu


# ----------------------------------------------------------------------------
# Pallas kernel
# ----------------------------------------------------------------------------
def _same_pad_kernel(x_ref, o_ref, *, crop_top, crop_left, h, w,
                     pad_top, pad_bottom, pad_left, pad_right):
    """Write only the pad border as zeros, then store the input slab once.

    x_ref: (bc_tile, d2, d3)        VMEM (full, uncropped spatial extents)
    o_ref: (bc_tile, h_out, w_out)  VMEM
    All offsets/sizes are Python ints (static) -> static-slice stores only.
    """
    bc = o_ref.shape[0]
    w_out = o_ref.shape[2]
    dt = o_ref.dtype

    # --- border-only zero fill (covers everything outside the interior) ----
    if pad_top:
        o_ref[:, pl.ds(0, pad_top), :] = jnp.zeros((bc, pad_top, w_out), dt)
    if pad_bottom:
        o_ref[:, pl.ds(pad_top + h, pad_bottom), :] = (
            jnp.zeros((bc, pad_bottom, w_out), dt))
    if pad_left:
        o_ref[:, pl.ds(pad_top, h), pl.ds(0, pad_left)] = (
            jnp.zeros((bc, h, pad_left), dt))
    if pad_right:
        o_ref[:, pl.ds(pad_top, h), pl.ds(pad_left + w, pad_right)] = (
            jnp.zeros((bc, h, pad_right), dt))

    # --- interior: single static-offset copy of the (possibly cropped) slab -
    o_ref[:, pl.ds(pad_top, h), pl.ds(pad_left, w)] = (
        x_ref[:, pl.ds(crop_top, h), pl.ds(crop_left, w)])


# ----------------------------------------------------------------------------
# Pad arithmetic — faithful transcription of SamePad2d.forward
# ----------------------------------------------------------------------------
def _pair(v):
    return (v, v) if isinstance(v, int) else (int(v[0]), int(v[1]))


def same_pad_amounts(d2, d3, kernel_size, stride):
    """Returns ((pad_d2_lo, pad_d2_hi), (pad_d3_lo, pad_d3_hi)).

    Matches the reference exactly: "width" pads are computed from input dim 2
    with kernel_size[0]/stride[0], "height" pads from dim 3 with
    kernel_size[1]/stride[1]; F.pad(input, (l, r, t, b)) applies (l, r) to the
    last dim (dim 3) and (t, b) to dim 2.
    """
    k0, k1 = _pair(kernel_size)
    s0, s1 = _pair(stride)
    in_width = d2                    # names follow the reference module
    in_height = d3
    out_width = math.ceil(float(in_width) / float(s0))
    out_height = math.ceil(float(in_height) / float(s1))
    pad_along_width = (out_width - 1) * s0 + k0 - in_width
    pad_along_height = (out_height - 1) * s1 + k1 - in_height
    pad_left = math.floor(pad_along_width / 2)
    pad_top = math.floor(pad_along_height / 2)
    pad_right = pad_along_width - pad_left
    pad_bottom = pad_along_height - pad_top
    return (pad_top, pad_bottom), (pad_left, pad_right)


# ----------------------------------------------------------------------------
# Wrapper
# ----------------------------------------------------------------------------
def _round_up(x, m):
    return ((x + m - 1) // m) * m


def _vmem_capacity_bytes():
    """Detected per-core VMEM capacity; conservative default = v7x (64 MiB)."""
    try:
        cap = int(getattr(pltpu.get_tpu_info(), "vmem_capacity_bytes", 0))
    except Exception:
        cap = 0
    if cap <= 0:
        cap = 64 * 1024 * 1024
    return max(16 * 1024 * 1024, min(cap, 128 * 1024 * 1024))


def same_pad_2d(x, kernel_size, stride, *, bc_tile=None):
    """SamePad2d.forward for x of shape (N, C, D2, D3) (PyTorch NCHW layout)."""
    N, C, d2, d3 = x.shape
    (p2l, p2h), (p3l, p3h) = same_pad_amounts(d2, d3, kernel_size, stride)

    if (p2l, p2h, p3l, p3h) == (0, 0, 0, 0):
        return x                      # F.pad with all-zero pads: pass-through

    # F.pad with negative values crops; fold the crop into static in-kernel
    # slice offsets so the kernel only ever applies non-negative pads and no
    # extra HBM copy of the input is materialized.
    crop2, crop3 = max(-p2l, 0), max(-p3l, 0)
    h = d2 + min(p2l, 0) + min(p2h, 0)        # interior extent along dim 2
    w = d3 + min(p3l, 0) + min(p3h, 0)        # interior extent along dim 3
    pt, pb = max(p2l, 0), max(p2h, 0)
    plft, prt = max(p3l, 0), max(p3h, 0)
    h_out, w_out = h + pt + pb, w + plft + prt

    nc = N * C
    itemsize = jnp.dtype(x.dtype).itemsize
    sub_g = {4: 8, 2: 16, 1: 32}.get(itemsize, 8)     # sublane granule

    # Layout-true per-image VMEM footprint: (sublane, 128)-padded tiles,
    # double-buffered input + output blocks.
    def padded_bytes(rows, cols):
        return _round_up(rows, sub_g) * _round_up(cols, 128) * itemsize

    per_bc_buffered = 2 * (padded_bytes(d2, d3) + padded_bytes(h_out, w_out))

    vmem_cap = _vmem_capacity_bytes()
    block_budget = (vmem_cap * 3) // 8        # ~24 MiB on v7x, ~48 MiB v5e/v6e
    vmem_limit = (vmem_cap * 3) // 4          # ~48 MiB on v7x, ~96 MiB v5e/v6e

    if bc_tile is None:
        bc_tile = max(1, min(nc, block_budget // max(per_bc_buffered, 1)))
        # Keep >= ~min(nc, 4) grid steps: "parallel" axis feeds both v7x
        # TensorCores and the pipeline always has a block in flight.
        bc_tile = min(bc_tile, max(1, pl.cdiv(nc, min(nc, 4))))
    bc_tile = max(1, min(int(bc_tile), nc))
    grid = (pl.cdiv(nc, bc_tile),)            # ragged last block is fine here
    vmem_limit = max(vmem_limit, per_bc_buffered * bc_tile + (2 << 20))

    kernel = functools.partial(
        _same_pad_kernel, crop_top=crop2, crop_left=crop3, h=h, w=w,
        pad_top=pt, pad_bottom=pb, pad_left=plft, pad_right=prt)

    out = pl.pallas_call(
        kernel,
        out_shape=jax.ShapeDtypeStruct((nc, h_out, w_out), x.dtype),
        grid_spec=pltpu.PrefetchScalarGridSpec(
            num_scalar_prefetch=0,
            grid=grid,
            in_specs=[pl.BlockSpec((bc_tile, d2, d3), lambda i: (i, 0, 0))],
            out_specs=pl.BlockSpec((bc_tile, h_out, w_out),
                                   lambda i: (i, 0, 0)),
        ),
        compiler_params=pltpu.CompilerParams(
            dimension_semantics=("parallel",),     # shards across TCs on v7x
            vmem_limit_bytes=int(vmem_limit),
        ),
    )(x.reshape(nc, d2, d3))
    return out.reshape(N, C, h_out, w_out)


# ----------------------------------------------------------------------------
# Pure-JAX reference (for correctness checking only)
# ----------------------------------------------------------------------------
def same_pad_2d_reference(x, kernel_size, stride):
    (p2l, p2h), (p3l, p3h) = same_pad_amounts(x.shape[2], x.shape[3],
                                              kernel_size, stride)
    s2, e2 = max(-p2l, 0), x.shape[2] + min(p2h, 0)
    s3, e3 = max(-p3l, 0), x.shape[3] + min(p3h, 0)
    xi = x[:, :, s2:e2, s3:e3]
    return jnp.pad(xi, ((0, 0), (0, 0),
                        (max(p2l, 0), max(p2h, 0)),
                        (max(p3l, 0), max(p3h, 0))))


if __name__ == "__main__":
    key = jax.random.PRNGKey(0)
    k1, k2 = jax.random.split(key)

    # Case 1: kernel=3, stride=1 -> symmetric (1,1) pad on both spatial dims.
    x = jax.random.normal(k1, (2, 4, 16, 16), jnp.float32)
    y1 = jax.block_until_ready(same_pad_2d(x, kernel_size=3, stride=1))
    r1 = same_pad_2d_reference(x, 3, 1)
    assert y1.shape == (2, 4, 18, 18), y1.shape
    assert bool(jnp.array_equal(y1, r1))

    # Case 2: kernel=3, stride=2 -> asymmetric (0,1) pad (exercises offsets).
    y2 = jax.block_until_ready(same_pad_2d(x, kernel_size=3, stride=2))
    r2 = same_pad_2d_reference(x, 3, 2)
    assert y2.shape == (2, 4, 17, 17), y2.shape
    assert bool(jnp.array_equal(y2, r2))

    # Case 3: non-square input + per-axis kernel/stride (exercises the
    # module's width/height cross-over exactly as F.pad applies it).
    x3 = jax.random.normal(k2, (2, 4, 13, 10), jnp.float32)
    y3 = jax.block_until_ready(same_pad_2d(x3, kernel_size=(5, 3), stride=(2, 1)))
    r3 = same_pad_2d_reference(x3, (5, 3), (2, 1))
    assert y3.shape == (2, 4, 15, 14), y3.shape
    assert bool(jnp.array_equal(y3, r3))

    # Case 4: kernel=1, stride=2 -> negative pads (F.pad crop path, handled by
    # static in-kernel slice offsets).
    y4 = jax.block_until_ready(same_pad_2d(x, kernel_size=1, stride=2))
    r4 = same_pad_2d_reference(x, 1, 2)
    assert y4.shape == (2, 4, 15, 15), y4.shape
    assert bool(jnp.array_equal(y4, r4))

    print("KERNEL_OK")
</pallas_src>

<mosaic_0001>
module attributes {stable_mosaic.version = 11 : i64} {
  func.func @_same_pad_kernel(%arg0: i32, %arg1: memref<2x16x16xf32, #tpu.memory_space<vmem>>, %arg2: memref<2x18x18xf32, #tpu.memory_space<vmem>>) attributes {dimension_semantics = [#tpu.dimension_semantics<parallel>], iteration_bounds = array<i64: 4>, scalar_prefetch = 0 : i64, scratch_operands = 0 : i64, tpu.core_type = #tpu.core_type<tc>, window_params = [{transform_indices = @transform_0, window_bounds = array<i64: 2, 16, 16>}, {transform_indices = @transform_1, window_bounds = array<i64: 2, 18, 18>}]} {
    %cst = arith.constant 0.000000e+00 : f32
    %0 = vector.broadcast %cst : f32 to vector<2x1x18xf32>
    %c0 = arith.constant 0 : index
    %c0_0 = arith.constant 0 : index
    %c0_1 = arith.constant 0 : index
    %1 = vector.load %arg2[%c0, %c0_0, %c0_1] : memref<2x18x18xf32, #tpu.memory_space<vmem>>, vector<2x1x18xf32>
    tpu.vector_store %arg2[%c0, %c0_0, %c0_1], %0 {strides = array<i32>} : memref<2x18x18xf32, #tpu.memory_space<vmem>>, vector<2x1x18xf32>,
    %cst_2 = arith.constant 0.000000e+00 : f32
    %2 = vector.broadcast %cst_2 : f32 to vector<2x1x18xf32>
    %c0_3 = arith.constant 0 : index
    %c17 = arith.constant 17 : index
    %c0_4 = arith.constant 0 : index
    %3 = vector.load %arg2[%c0_3, %c17, %c0_4] : memref<2x18x18xf32, #tpu.memory_space<vmem>>, vector<2x1x18xf32>
    tpu.vector_store %arg2[%c0_3, %c17, %c0_4], %2 {strides = array<i32>} : memref<2x18x18xf32, #tpu.memory_space<vmem>>, vector<2x1x18xf32>,
    %cst_5 = arith.constant 0.000000e+00 : f32
    %4 = vector.broadcast %cst_5 : f32 to vector<2x16x1xf32>
    %c0_6 = arith.constant 0 : index
    %c1 = arith.constant 1 : index
    %c0_7 = arith.constant 0 : index
    %5 = vector.load %arg2[%c0_6, %c1, %c0_7] : memref<2x18x18xf32, #tpu.memory_space<vmem>>, vector<2x16x1xf32>
    tpu.vector_store %arg2[%c0_6, %c1, %c0_7], %4 {strides = array<i32>} : memref<2x18x18xf32, #tpu.memory_space<vmem>>, vector<2x16x1xf32>,
    %cst_8 = arith.constant 0.000000e+00 : f32
    %6 = vector.broadcast %cst_8 : f32 to vector<2x16x1xf32>
    %c0_9 = arith.constant 0 : index
    %c1_10 = arith.constant 1 : index
    %c17_11 = arith.constant 17 : index
    %7 = vector.load %arg2[%c0_9, %c1_10, %c17_11] : memref<2x18x18xf32, #tpu.memory_space<vmem>>, vector<2x16x1xf32>
    tpu.vector_store %arg2[%c0_9, %c1_10, %c17_11], %6 {strides = array<i32>} : memref<2x18x18xf32, #tpu.memory_space<vmem>>, vector<2x16x1xf32>,
    %c0_12 = arith.constant 0 : index
    %c0_13 = arith.constant 0 : index
    %c0_14 = arith.constant 0 : index
    %8 = vector.load %arg1[%c0_12, %c0_13, %c0_14] : memref<2x16x16xf32, #tpu.memory_space<vmem>>, vector<2x16x16xf32>
    %c0_15 = arith.constant 0 : index
    %c1_16 = arith.constant 1 : index
    %c1_17 = arith.constant 1 : index
    %9 = vector.load %arg2[%c0_15, %c1_16, %c1_17] : memref<2x18x18xf32, #tpu.memory_space<vmem>>, vector<2x16x16xf32>
    tpu.vector_store %arg2[%c0_15, %c1_16, %c1_17], %8 {strides = array<i32>} : memref<2x18x18xf32, #tpu.memory_space<vmem>>, vector<2x16x16xf32>,
    return
  }
  func.func @transform_0(%arg0: i32) -> (i32, i32, i32) {
    %c0_i32 = arith.constant 0 : i32
    %c0_i32_0 = arith.constant 0 : i32
    %c0_i32_1 = arith.constant 0 : i32
    return %arg0, %c0_i32, %c0_i32_0 : i32, i32, i32
  }
  func.func @transform_1(%arg0: i32) -> (i32, i32, i32) {
    %c0_i32 = arith.constant 0 : i32
    %c0_i32_0 = arith.constant 0 : i32
    %c0_i32_1 = arith.constant 0 : i32
    return %arg0, %c0_i32, %c0_i32_0 : i32, i32, i32
  }
}

</mosaic_0001>

<llo_original>
// kernel: tpu_custom_call.1
$region0: #{tpu_custom_call.1}
  #allocation0 [shape = 'u32[]', space=smem, size = 0x4, offset = 0x4, fixed_abs, tag = 'smem constant byte address 0x4 - core index']
  #allocation1 [shape = 'u32[144,128]{1,0:T(1,128)}', space=vmem, size = 0x12000, scoped, tag = 'internal scratch']
  %s0 = inlined_call_operand.hbm [shape: f32[8,16,16], index: 0, kind: input, shape index: {}]
  %s1 = inlined_call_operand.vmem [shape: f32[8,18,18], index: 1, kind: output, shape index: {}]
  %s2 = sld [smem:[#allocation0]]
  $region41: #{tpu_custom_call.1} parent=0
    _
  %s4 = ssub.s32 1, %s2
  %s5 = scalar_select 0, %s4, %s2
  $region1: #{tpu_custom_call.1} parent=0
    #allocation2 [shape = 'u8[32768]{0}', space=vmem, size = 0x8000, scoped, tag = 'input window, operand 0']
    #allocation3 [shape = 's32[2]{0}', space=sflag, size = 0x8, scoped, tag = 'scoped memory for tpu_custom_call.1']
    %6 = vsyncpa [#allocation3], 0
    %s7 = scalar_lea.sflag [#allocation3], 1
    %8 = vsyncpa %s7, 0
    loop: start=0, step=1, limit=6
    $region2: #{tpu_custom_call.1} parent=1 // loop_pre_header
      _
    $region3: #{tpu_custom_call.1} parent=1 // loop_header
      %s10 = sphi 0, %s14
      %p11 = scmp.ge.s32.totalorder %s10, 6
      %s20 = sphi 0, %s22
      %s23 = sphi 0, %s20
      %s24 = sphi 0, %s23
      %s40 = sphi 0, %s24
      %s46 = sphi 0, %s48
      %s49 = sphi 0, %s46
      %s50 = sphi 0, %s49
      %s66 = sphi 0, %s50
    $region4: #{tpu_custom_call.1} parent=1 // loop_header_branch
      %13 = sbr.rel (%p11) target = $region8
    $region5: #{tpu_custom_call.1} parent=1 // loop_body
      %s15 = ssub.s32 %s10, 1
      %s16 = ssub.s32 %s10, 2
      %s17 = sadd.s32 %s10, 1
      %s18 = ssub.s32 %s10, %s17
      %p19 = scmp.eq.s32.totalorder %s18, 0
      %s21 = sadd.s32 %s20, 1
      %s22 = scalar_select %p19, %s20, %s21
      %p25 = pneg %p19
      %p26 = scmp.eq.s32.totalorder %s10, 3
      %p27 = por %p25, %p26
      %p28 = scmp.ne.s32.totalorder %s20, %s23
      %p29 = scmp.eq.s32.totalorder %s10, 0
      %p30 = por %p28, %p29
      %p31 = scmp.ne.s32.totalorder %s20, %s23
      %p32 = scmp.eq.s32.totalorder %s15, 3
      %p33 = por %p31, %p32
      %p34 = scmp.ne.s32.totalorder %s23, %s24
      %p35 = scmp.eq.s32.totalorder %s15, 0
      %p36 = por %p34, %p35
      %p37 = scmp.ne.s32.totalorder %s23, %s24
      %p38 = scmp.eq.s32.totalorder %s16, 3
      %p39 = por %p37, %p38
      %p41 = scmp.ne.s32.totalorder %s24, %s40
      %p42 = scmp.eq.s32.totalorder %s16, 0
      %p43 = por %p41, %p42
      %s44 = ssub.s32 %s10, %s17
      %p45 = scmp.eq.s32.totalorder %s44, 0
      %s47 = sadd.s32 %s46, 1
      %s48 = scalar_select %p45, %s46, %s47
      %p51 = pneg %p45
      %p52 = scmp.eq.s32.totalorder %s10, 3
      %p53 = por %p51, %p52
      %p54 = scmp.ne.s32.totalorder %s46, %s49
      %p55 = scmp.eq.s32.totalorder %s10, 0
      %p56 = por %p54, %p55
      %p57 = scmp.ne.s32.totalorder %s46, %s49
      %p58 = scmp.eq.s32.totalorder %s15, 3
      %p59 = por %p57, %p58
      %p60 = scmp.ne.s32.totalorder %s49, %s50
      %p61 = scmp.eq.s32.totalorder %s15, 0
      %p62 = por %p60, %p61
      %p63 = scmp.ne.s32.totalorder %s49, %s50
      %p64 = scmp.eq.s32.totalorder %s16, 3
      %p65 = por %p63, %p64
      %p67 = scmp.ne.s32.totalorder %s50, %s66
      %p68 = scmp.eq.s32.totalorder %s16, 0
      %p69 = por %p67, %p68
      %p70 = scmp.le.s32.totalorder 1, %s10
      %p71 = scmp.lt.s32.totalorder %s10, 5
      %p72 = pnand %p70, %p71
      %p73 = pneg %p72
      // Predicated region
      $region9: #{tpu_custom_call.1} parent=5 // pred_check
        _
      $region10: #{tpu_custom_call.1} parent=5 // pred_check_branch
        %75 = sbr.rel (%p72) target = $region12
      $region11: #{tpu_custom_call.1} parent=5 // pred_region
        %s76 = ssub.s32 %s10, 1
      $region12: #{tpu_custom_call.1} parent=5 // pred_fallthru
        _
      %p77 = scmp.lt.s32.totalorder %s10, 4
      // Predicated region
      $region13: #{tpu_custom_call.1} parent=5 // pred_check
        %p78 = pneg %p77
      $region14: #{tpu_custom_call.1} parent=5 // pred_check_branch
        %80 = sbr.rel (%p78) target = $region16
      $region15: #{tpu_custom_call.1} parent=5 // pred_region
        // Predicated region
        $region17: #{tpu_custom_call.1} parent=15 // pred_check
          %p81 = pneg %p30
        $region18: #{tpu_custom_call.1} parent=15 // pred_check_branch
          %83 = sbr.rel (%p81) target = $region20
        $region19: #{tpu_custom_call.1} parent=15 // pred_region
          %s84 = sand.u32 %s20, 1
          %s85 = scalar_lea.sflag [#allocation3], %s84
          %s86 = sand.u32 %s20, 1
          %s87 = smul.addr %s86, 32
          %s88 = scalar_lea.vmem [#allocation2], %s87
          %s89 = smul.u32 2, %s10
          %s91 = ssub.s32 512, 512
          %92 = vsyncadd %s85, %s91
          %s93 = smul.addr %s89, 2
          %s94 = smul.addr %s93, 128
          %s95 = scalar_lea.hbm %s0, %s94
          %s96 = sshll.u32 %s88, 4
          %s97 = int_to_ptr.vmem [resolvable:$true] %s96
          %102 = dma.hbm_to_vmem [thread:$0]  %s95, 512, %s97, %s85, 128, 128, 8
        $region20: #{tpu_custom_call.1} parent=15 // pred_fallthru
          _
      $region16: #{tpu_custom_call.1} parent=5 // pred_fallthru
        _
      %p103 = scmp.le.s32.totalorder 1, %s10
      %p104 = scmp.lt.s32.totalorder %s10, 5
      %p105 = pnand %p103, %p104
      %p106 = pneg %p105
      // Predicated region
      $region21: #{tpu_custom_call.1} parent=5 // pred_check
        _
      $region22: #{tpu_custom_call.1} parent=5 // pred_check_branch
        %108 = sbr.rel (%p105) target = $region24
      $region23: #{tpu_custom_call.1} parent=5 // pred_region
        %s109 = ssub.s32 %s10, 1
        %s110 = sand.u32 %s23, 1
        %s111 = scalar_lea.sflag [#allocation3], %s110
        %s112 = sand.u32 %s23, 1
        %s113 = smul.addr %s112, 32
        %s114 = scalar_lea.vmem [#allocation2], %s113
        // Predicated region
        $region25: #{tpu_custom_call.1} parent=23 // pred_check
          %p115 = pneg %p36
        $region26: #{tpu_custom_call.1} parent=23 // pred_check_branch
          %117 = sbr.rel (%p115) target = $region28
        $region27: #{tpu_custom_call.1} parent=23 // pred_region
          %118 = dma.done %s111, 512
        $region28: #{tpu_custom_call.1} parent=23 // pred_fallthru
          _
        %s119 = sand.u32 %s23, 1
        %s120 = scalar_lea.sflag [#allocation3], %s119
        %s121 = sand.u32 %s23, 1
        %s122 = smul.addr %s121, 32
        %s123 = scalar_lea.vmem [#allocation2], %s122
        %p124 = pneg %p36
        %p125 = pneg %p33
        %p126 = pneg %p62
        %p127 = pneg %p59
        %s128 = smul.u32 2, %s15
        %p129 = scmp.lt.s32.totalorder %s128, 7
        %s130 = scalar_select %p129, %s128, 7
        %s131 = smul.addr %s130, 3
        %s132 = smul.addr %s131, 8
        %s133 = scalar_lea.vmem %s1, %s132
        %s134 = smul.u32 2, %s15
        %s135 = smul.u32 2, %s15
        %p136 = scmp.lt.s32.totalorder %s135, 7
        %s137 = scalar_select %p136, %s135, 7
        %s138 = smul.addr %s137, 3
        %s139 = smul.addr %s138, 8
        %s140 = scalar_lea.vmem %s1, %s139
        %s141 = smul.u32 2, %s15
        %vm142 = vcmask 139264
        %143 = vst.msk [vmem:[%s140] sm:$0x1] %vm142, 0.0
        %144 = vst.msk [vmem:[%s140 + $0x18] sm:$0x1] %vm142, 0.0
        %145 = vst.msk [vmem:[%s140 + $0x11] sm:$0x1] %vm142, 0.0
        %146 = vst.msk [vmem:[%s140 + $0x29] sm:$0x1] %vm142, 0.0
        %vm147 = vcmask 7168
        %148 = vst.msk [vmem:[%s140 + $0x1] sm:$0xff] %vm147, 0.0
        %149 = vst.msk [vmem:[%s140 + $0x9] sm:$0xff] %vm147, 0.0
        %150 = vst.msk [vmem:[%s140 + $0x19] sm:$0xff] %vm147, 0.0
        %151 = vst.msk [vmem:[%s140 + $0x21] sm:$0xff] %vm147, 0.0
        %vm152 = vcmask 146568
        %153 = vst.msk [vmem:[%s140 + $0x1] sm:$0xff] %vm152, 0.0
        %154 = vst.msk [vmem:[%s140 + $0x9] sm:$0xff] %vm152, 0.0
        %155 = vst.msk [vmem:[%s140 + $0x19] sm:$0xff] %vm152, 0.0
        %156 = vst.msk [vmem:[%s140 + $0x21] sm:$0xff] %vm152, 0.0
        %v157 = vld [vmem:[%s114] sm:$0xff]
        %v158 = vld [vmem:[%s114 + $0x8] sm:$0xff]
        %v159 = vld [vmem:[%s114 + $0x10] sm:$0xff]
        %v160 = vld [vmem:[%s114 + $0x18] sm:$0xff]
        %165 = vrot.lane.b32.xlu0 %v157, 1
        %v166 = vpop.permute.xlu0 %165
        %167 = vrot.lane.b32.xlu0 %v158, 1
        %v168 = vpop.permute.xlu0 %167
        %169 = vrot.lane.b32.xlu0 %v159, 1
        %v170 = vpop.permute.xlu0 %169
        %171 = vrot.lane.b32.xlu0 %v160, 1
        %v172 = vpop.permute.xlu0 %171
        %vm177 = vcmask 138248
        %178 = vst.msk [vmem:[%s140 + $0x1] sm:$0xff] %vm177, %v166
        %179 = vst.msk [vmem:[%s140 + $0x9] sm:$0xff] %vm177, %v168
        %180 = vst.msk [vmem:[%s140 + $0x19] sm:$0xff] %vm177, %v170
        %181 = vst.msk [vmem:[%s140 + $0x21] sm:$0xff] %vm177, %v172
        %s182 = smul.u32 2, %s15
        %p183 = scmp.lt.s32.totalorder %s182, 7
        %s184 = scalar_select %p183, %s182, 7
        %s185 = smul.addr %s184, 3
        %s186 = smul.addr %s185, 8
        %s187 = scalar_lea.vmem %s1, %s186
        // Predicated region
        $region29: #{tpu_custom_call.1} parent=23 // pred_check
          %p188 = pneg %p59
        $region30: #{tpu_custom_call.1} parent=23 // pred_check_branch
          %190 = sbr.rel (%p188) target = $region32
        $region31: #{tpu_custom_call.1} parent=23 // pred_region
          %s191 = smul.u32 2, %s15
        $region32: #{tpu_custom_call.1} parent=23 // pred_fallthru
          _
      $region24: #{tpu_custom_call.1} parent=5 // pred_fallthru
        _
      %p192 = scmp.le.s32.totalorder 2, %s10
      // Predicated region
      $region33: #{tpu_custom_call.1} parent=5 // pred_check
        %p193 = pneg %p192
      $region34: #{tpu_custom_call.1} parent=5 // pred_check_branch
        %195 = sbr.rel (%p193) target = $region36
      $region35: #{tpu_custom_call.1} parent=5 // pred_region
        %s196 = ssub.s32 %s10, 2
        // Predicated region
        $region37: #{tpu_custom_call.1} parent=35 // pred_check
          %p197 = pneg %p65
        $region38: #{tpu_custom_call.1} parent=35 // pred_check_branch
          %199 = sbr.rel (%p197) target = $region40
        $region39: #{tpu_custom_call.1} parent=35 // pred_region
          %s200 = smul.u32 2, %s16
          %p201 = scmp.lt.s32.totalorder %s200, 7
          %s202 = scalar_select %p201, %s200, 7
          %s203 = smul.addr %s202, 3
          %s204 = smul.addr %s203, 8
          %s205 = scalar_lea.vmem %s1, %s204
        $region40: #{tpu_custom_call.1} parent=35 // pred_fallthru
          _
      $region36: #{tpu_custom_call.1} parent=5 // pred_fallthru
        _
    $region6: #{tpu_custom_call.1} parent=1 // loop_footer
      %s14 = sadd.s32 1, %s10
    $region7: #{tpu_custom_call.1} parent=1 // loop_footer_branch
      %9 = sbr.rel target = $region3
    $region8: #{tpu_custom_call.1} parent=1 // loop_exit
      _
    %206 = vsyncpa [#allocation3], 1
    %s207 = scalar_lea.sflag [#allocation3], 1
    %208 = vsyncpa %s207, 1

</llo_original>
